<compile_context>
chip_gen: v5e
topology: v5e:2x2
jax: 0.10.0
libtpu: 0.0.40
codegen_flags: <defaults>
</compile_context>

<pallas_src>
import math
from functools import partial

import jax
import jax.numpy as jnp
from jax import lax
from jax.experimental import pallas as pl
from jax.experimental.pallas import tpu as pltpu

# ----------------------------- model config (small) -----------------------------
DIM         = 64
N_HEADS     = 4
N_KV_HEADS  = 2
HEAD_DIM    = DIM // N_HEADS          # 16
N_REP       = N_HEADS // N_KV_HEADS   # 2
MULTIPLE_OF = 32
NORM_EPS    = 1e-5
L2_EPS      = 1e-6                    # the L2Norm module's eps

_hidden = int(2 * (4 * DIM) / 3)
FFN_DIM = MULTIPLE_OF * ((_hidden + MULTIPLE_OF - 1) // MULTIPLE_OF)  # 192

Q_DIM   = N_HEADS * HEAD_DIM          # 64
KV_DIM  = N_KV_HEADS * HEAD_DIM       # 32
QK_DIM  = Q_DIM + KV_DIM              # 96  (q and k, both L2-normed)
QKV_DIM = Q_DIM + 2 * KV_DIM          # 128 (lane-dense fused QKV output)

BATCH = 2
SEQ   = 8


# ----------------------------- kernel helpers -----------------------------
def _block_mask(rows, cols, row_blk, col_blk):
    """0/1 float mask, 1 where row-block index == column-block index."""
    r = lax.broadcasted_iota(jnp.int32, (rows, cols), 0) // row_blk
    c = lax.broadcasted_iota(jnp.int32, (rows, cols), 1) // col_blk
    return (r == c).astype(jnp.float32)


# ----------------------------- standalone L2Norm kernel -----------------------------
def l2norm_kernel(x_ref, o_ref):
    x = x_ref[...].astype(jnp.float32)
    o_ref[...] = (x * lax.rsqrt(jnp.mean(x * x, axis=-1, keepdims=True) + L2_EPS)
                  ).astype(o_ref.dtype)


@jax.jit
def l2norm_forward(x):
    """Exactly the spec module: x * rsqrt(mean(x^2, -1) + 1e-6), any leading dims."""
    shape = x.shape
    x2 = x.reshape(-1, shape[-1])
    out = pl.pallas_call(
        l2norm_kernel,
        out_shape=jax.ShapeDtypeStruct(x2.shape, x.dtype),
        grid=(1,),
        in_specs=[pl.BlockSpec(x2.shape, lambda i: (0, 0))],
        out_specs=pl.BlockSpec(x2.shape, lambda i: (0, 0)),
        compiler_params=pltpu.CompilerParams(dimension_semantics=("arbitrary",)),
    )(x2)
    return out.reshape(shape)


# ----------------------------- fused encoder kernel -----------------------------
def encoder_kernel(x_ref, wqkv_ref, wo_ref, w13_ref, w2_ref, out_ref, *, batch, seq):
    """All B*S tokens in one invocation (single grid step)."""
    x = x_ref[...].astype(jnp.float32)                                  # (T, D)

    # ---- attention RMSNorm (eps=1e-5); its weight is folded into wqkv ----
    xn = x * lax.rsqrt(jnp.mean(x * x, axis=-1, keepdims=True) + NORM_EPS)

    # ---- fused QKV projection: one lane-dense (T,128) matmul ----
    qkv = jnp.dot(xn, wqkv_ref[...], preferred_element_type=jnp.float32)
    qk = qkv[:, :QK_DIM]                                                # (T, 96)
    v  = qkv[:, QK_DIM:]                                                # (T, 32)

    # ---- L2Norm (qk-norm, eps=1e-6) per head, reshape-free, q & k merged ----
    ss = jnp.dot(qk * qk, _block_mask(QK_DIM, QK_DIM, HEAD_DIM, HEAD_DIM),
                 preferred_element_type=jnp.float32)                    # (T, 96)
    col = lax.broadcasted_iota(jnp.int32, (1, QK_DIM), 1)
    # fold 1/sqrt(head_dim) score scale into q's columns only
    scale_cols = jnp.where(col < Q_DIM, 1.0 / math.sqrt(HEAD_DIM), 1.0)
    qkn = qk * lax.rsqrt(ss * (1.0 / HEAD_DIM) + L2_EPS) * scale_cols
    qn = qkn[:, :Q_DIM]                                                 # (T, 64)
    kn = qkn[:, Q_DIM:]                                                 # (T, 32)

    # ---- GQA: repeat each kv head N_REP times along the lane axis ----
    kr = jnp.concatenate([kn[:, j * HEAD_DIM:(j + 1) * HEAD_DIM]
                          for j in range(N_KV_HEADS) for _ in range(N_REP)], axis=1)
    vr = jnp.concatenate([v[:, j * HEAD_DIM:(j + 1) * HEAD_DIM]
                          for j in range(N_KV_HEADS) for _ in range(N_REP)], axis=1)

    # ---- attention: block-diagonal K/V -> 3 matmuls per batch, no head loop ----
    hs = N_HEADS * seq
    mask_bd = _block_mask(hs, Q_DIM, seq, HEAD_DIM)   # (H*S, D): row blk S, col blk Dh
    mask_gs = _block_mask(hs, hs, seq, seq)           # (H*S, H*S): per-head col groups

    outs = []
    for b in range(batch):
        r0 = b * seq
        q_b  = qn[r0:r0 + seq, :]                                       # (S, 64)
        # block-diagonal K, V: block h holds head h's (S, Dh) slab
        k_bd = jnp.tile(kr[r0:r0 + seq, :], (N_HEADS, 1)) * mask_bd     # (H*S, 64)
        v_bd = jnp.tile(vr[r0:r0 + seq, :], (N_HEADS, 1)) * mask_bd     # (H*S, 64)

        # scores for ALL heads in one NT matmul: (S, H*S), column block h = head h
        s = lax.dot_general(q_b, k_bd, (((1,), (1,)), ((), ())),
                            preferred_element_type=jnp.float32)
        # softmax per head-block; subtracting the global row max is valid since
        # softmax is shift-invariant and it upper-bounds every block's max
        p = jnp.exp(s - jnp.max(s, axis=-1, keepdims=True))
        denom = jnp.dot(p, mask_gs, preferred_element_type=jnp.float32)
        p = p / denom                                                   # exact divide
        # PV for ALL heads: (S, 64), head h lands in columns [h*Dh, (h+1)*Dh)
        outs.append(jnp.dot(p, v_bd, preferred_element_type=jnp.float32))

    o_all = jnp.concatenate(outs, axis=0)                               # (T, 64)
    h1 = x + jnp.dot(o_all, wo_ref[...], preferred_element_type=jnp.float32)

    # ---- FFN RMSNorm (weight folded into w13) + SwiGLU ----
    hn = h1 * lax.rsqrt(jnp.mean(h1 * h1, axis=-1, keepdims=True) + NORM_EPS)
    gu = jnp.dot(hn, w13_ref[...], preferred_element_type=jnp.float32)  # (T, 2F)
    g = gu[:, :FFN_DIM]
    u = gu[:, FFN_DIM:]
    ffn = jnp.dot(g * jax.nn.sigmoid(g) * u, w2_ref[...],
                  preferred_element_type=jnp.float32)                   # (T, D)

    out_ref[...] = (h1 + ffn).astype(out_ref.dtype)


# ----------------------------- wrappers -----------------------------
def fuse_params(params):
    """Done ONCE at init: fuse projection weights and fold the RMSNorm weights in."""
    wqkv = jnp.concatenate([params["wq"], params["wk"], params["wv"]], axis=1)
    w13  = jnp.concatenate([params["w1"], params["w3"]], axis=1)
    wqkv = wqkv * params["attn_norm_w"].reshape(DIM, 1)   # diag(w) @ Wqkv
    w13  = w13  * params["ffn_norm_w"].reshape(DIM, 1)    # diag(w) @ W13
    assert wqkv.shape[1] == QKV_DIM, wqkv.shape
    assert w13.shape[1] == 2 * FFN_DIM, w13.shape
    return {"wqkv": wqkv, "wo": params["wo"], "w13": w13, "w2": params["w2"]}


@jax.jit
def encoder_block_forward(x, fused):
    B, S, D = x.shape
    x2 = x.reshape(B * S, D)                                            # free bitcast

    def full(a):
        return pl.BlockSpec(a.shape, lambda i: (0, 0))

    args = (x2, fused["wqkv"], fused["wo"], fused["w13"], fused["w2"])
    out = pl.pallas_call(
        partial(encoder_kernel, batch=B, seq=S),
        out_shape=jax.ShapeDtypeStruct((B * S, D), jnp.float32),
        grid=(1,),                                   # single step (single-TC optimal)
        in_specs=[full(a) for a in args],
        out_specs=full(x2),
        compiler_params=pltpu.CompilerParams(dimension_semantics=("arbitrary",)),
    )(*args)
    return out.reshape(B, S, D)


# ----------------------------- pure-JAX reference -----------------------------
def reference_forward(x, p):
    def rmsnorm(v, w):
        return w * (v * lax.rsqrt(jnp.mean(v * v, -1, keepdims=True) + NORM_EPS))

    def l2norm(v):
        return v * lax.rsqrt(jnp.mean(v * v, -1, keepdims=True) + L2_EPS)

    B, S, D = x.shape
    xn = rmsnorm(x, p["attn_norm_w"][0])
    q = (xn @ p["wq"]).reshape(B, S, N_HEADS, HEAD_DIM)
    k = (xn @ p["wk"]).reshape(B, S, N_KV_HEADS, HEAD_DIM)
    v = (xn @ p["wv"]).reshape(B, S, N_KV_HEADS, HEAD_DIM)
    q, k = l2norm(q), l2norm(k)
    k = jnp.repeat(k, N_REP, axis=2)
    v = jnp.repeat(v, N_REP, axis=2)
    q, k, v = (t.transpose(0, 2, 1, 3) for t in (q, k, v))
    scores = jnp.einsum("bhqd,bhkd->bhqk", q, k) / math.sqrt(HEAD_DIM)
    probs = jax.nn.softmax(scores, axis=-1)
    o = jnp.einsum("bhqk,bhkd->bhqd", probs, v).transpose(0, 2, 1, 3).reshape(B, S, -1)
    h = x + o @ p["wo"]

    hn = rmsnorm(h, p["ffn_norm_w"][0])
    g = hn @ p["w1"]
    ffn = (jax.nn.silu(g) * (hn @ p["w3"])) @ p["w2"]
    return h + ffn


# ----------------------------- main -----------------------------
if __name__ == "__main__":
    key = jax.random.PRNGKey(0)
    ks = jax.random.split(key, 11)

    params = {
        # non-trivial norm weights so the diag-fold into wqkv/w13 is actually tested
        "attn_norm_w": 1.0 + 0.1 * jax.random.normal(ks[8], (1, DIM), jnp.float32),
        "ffn_norm_w":  1.0 + 0.1 * jax.random.normal(ks[9], (1, DIM), jnp.float32),
        # Linear weights stored (in_dim, out_dim)  (y = x @ W  ==  torch x @ W.T)
        "wq": jax.random.normal(ks[0], (DIM, N_HEADS * HEAD_DIM), jnp.float32) * 0.05,
        "wk": jax.random.normal(ks[1], (DIM, N_KV_HEADS * HEAD_DIM), jnp.float32) * 0.05,
        "wv": jax.random.normal(ks[2], (DIM, N_KV_HEADS * HEAD_DIM), jnp.float32) * 0.05,
        "wo": jax.random.normal(ks[3], (N_HEADS * HEAD_DIM, DIM), jnp.float32) * 0.05,
        "w1": jax.random.normal(ks[4], (DIM, FFN_DIM), jnp.float32) * 0.05,
        "w3": jax.random.normal(ks[5], (DIM, FFN_DIM), jnp.float32) * 0.05,
        "w2": jax.random.normal(ks[6], (FFN_DIM, DIM), jnp.float32) * 0.05,
    }
    fused = fuse_params(params)    # once, outside the jitted forward

    # 1) standalone L2Norm kernel == the spec's torch module forward
    xq = jax.random.normal(ks[10], (BATCH, SEQ, N_HEADS, HEAD_DIM), jnp.float32)
    l2_out = jax.block_until_ready(l2norm_forward(xq))
    l2_ref = xq * lax.rsqrt(jnp.mean(xq * xq, -1, keepdims=True) + L2_EPS)
    assert l2_out.shape == xq.shape
    assert jnp.allclose(l2_out, l2_ref, atol=1e-5, rtol=1e-5), "L2Norm mismatch"

    # 2) fused encoder block (L2Norm used as the qk-norm inside attention)
    x = jax.random.normal(ks[7], (BATCH, SEQ, DIM), jnp.float32)
    out = jax.block_until_ready(encoder_block_forward(x, fused))
    ref = reference_forward(x, params)
    assert out.shape == (BATCH, SEQ, DIM)
    assert jnp.allclose(out, ref, atol=2e-3, rtol=2e-3), "encoder mismatch vs reference"

    print("KERNEL_OK")
</pallas_src>

<mosaic_0001>
module attributes {stable_mosaic.version = 11 : i64} {
  func.func @l2norm_kernel(%arg0: i32, %arg1: memref<64x16xf32, #tpu.memory_space<vmem>>, %arg2: memref<64x16xf32, #tpu.memory_space<vmem>>) attributes {dimension_semantics = [#tpu.dimension_semantics<arbitrary>], iteration_bounds = array<i64: 1>, scalar_prefetch = 0 : i64, scratch_operands = 0 : i64, tpu.core_type = #tpu.core_type<tc>, window_params = [{pipeline_mode = #tpu.pipeline_mode<synchronous>, transform_indices = @transform_0, window_bounds = array<i64: 64, 16>}, {pipeline_mode = #tpu.pipeline_mode<synchronous>, transform_indices = @transform_1, window_bounds = array<i64: 64, 16>}]} {
    %c0 = arith.constant 0 : index
    %c0_0 = arith.constant 0 : index
    %0 = vector.load %arg1[%c0, %c0_0] : memref<64x16xf32, #tpu.memory_space<vmem>>, vector<64x16xf32>
    %1 = arith.mulf %0, %0 : vector<64x16xf32>
    %cst = arith.constant dense<0.000000e+00> : vector<64xf32>
    %2 = vector.multi_reduction <add>, %1, %cst [1] : vector<64x16xf32> to vector<64xf32>
    %3 = vector.shape_cast %2 : vector<64xf32> to vector<64x1xf32>
    %cst_1 = arith.constant 1.600000e+01 : f32
    %4 = vector.broadcast %cst_1 : f32 to vector<64x1xf32>
    %5 = arith.divf %3, %4 : vector<64x1xf32>
    %cst_2 = arith.constant 9.99999997E-7 : f32
    %6 = vector.broadcast %cst_2 : f32 to vector<64x1xf32>
    %7 = arith.addf %5, %6 : vector<64x1xf32>
    %8 = math.rsqrt %7 : vector<64x1xf32>
    %9 = vector.broadcast %8 : vector<64x1xf32> to vector<64x16xf32>
    %10 = arith.mulf %0, %9 : vector<64x16xf32>
    %c0_3 = arith.constant 0 : index
    %c0_4 = arith.constant 0 : index
    %11 = vector.load %arg2[%c0_3, %c0_4] : memref<64x16xf32, #tpu.memory_space<vmem>>, vector<64x16xf32>
    tpu.vector_store %arg2[%c0_3, %c0_4], %10 {strides = array<i32>} : memref<64x16xf32, #tpu.memory_space<vmem>>, vector<64x16xf32>,
    return
  }
  func.func @transform_0(%arg0: i32) -> (i32, i32) {
    %c0_i32 = arith.constant 0 : i32
    %c0_i32_0 = arith.constant 0 : i32
    %c0_i32_1 = arith.constant 0 : i32
    return %c0_i32, %c0_i32_0 : i32, i32
  }
  func.func @transform_1(%arg0: i32) -> (i32, i32) {
    %c0_i32 = arith.constant 0 : i32
    %c0_i32_0 = arith.constant 0 : i32
    %c0_i32_1 = arith.constant 0 : i32
    return %c0_i32, %c0_i32_0 : i32, i32
  }
}

</mosaic_0001>

<llo_original>
// kernel: l2norm_forward.1
$region0: #{l2norm_forward.1}
  #allocation0 [shape = 'u32[]', space=smem, size = 0x4, offset = 0x4, fixed_abs, tag = 'smem constant byte address 0x4 - core index']
  #allocation1 [shape = 'u32[72,128]{1,0:T(1,128)}', space=vmem, size = 0x9000, scoped, tag = 'internal scratch']
  %s0 = inlined_call_operand.hbm [shape: f32[64,16], index: 0, kind: input, shape index: {}]
  %s1 = inlined_call_operand.hbm [shape: f32[64,16], index: 1, kind: output, shape index: {}]
  %s2 = sld [smem:[#allocation0]]
  $region18: #{l2norm_forward.1} parent=0
    _
  %s4 = ssub.s32 1, %s2
  %s5 = scalar_select 0, %s4, %s2
  $region1: #{l2norm_forward.1} parent=0
    #allocation2 [shape = 'u8[32768]{0}', space=vmem, size = 0x8000, scoped, tag = 'input window, operand 0, single buffered']
    #allocation3 [shape = 's32[1]{0}', space=sflag, size = 0x4, scoped, tag = 'scoped memory for l2norm_forward.1']
    #allocation4 [shape = 's32[1]{0}', space=sflag, size = 0x4, scoped, tag = 'scoped memory for l2norm_forward.1']
    #allocation5 [shape = 'u8[32768]{0}', space=vmem, size = 0x8000, scoped, tag = 'output window, operand 0, single buffered']
    %6 = vsyncpa [#allocation3], 0
    %7 = vsyncpa [#allocation4], 0
    // Predicated region
    $region2: #{l2norm_forward.1} parent=1 // pred_check
      _
    $region3: #{l2norm_forward.1} parent=1 // pred_check_branch
      %9 = sbr.rel (0) target = $region5
    $region4: #{l2norm_forward.1} parent=1 // pred_region
      %11 = vsyncadd [#allocation3], 0
      %s12 = sshll.u32 %s0, 4
      %s13 = int_to_ptr.hbm [resolvable:$true] %s12
      %s14 = sshll.u32 [#allocation2], 4
      %s15 = int_to_ptr.vmem [resolvable:$true] %s14
      %20 = dma.hbm_to_vmem [thread:$0]  %s13, 1024, %s15, [#allocation3], 128, 128, 8
    $region5: #{l2norm_forward.1} parent=1 // pred_fallthru
      _
    // Predicated region
    $region6: #{l2norm_forward.1} parent=1 // pred_check
      _
    $region7: #{l2norm_forward.1} parent=1 // pred_check_branch
      %22 = sbr.rel (0) target = $region9
    $region8: #{l2norm_forward.1} parent=1 // pred_region
      %24 = dma.done [#allocation3], 1024
    $region9: #{l2norm_forward.1} parent=1 // pred_fallthru
      _
    %v25 = vld [vmem:[#allocation2] sm:$0xff]
    %v26 = vld [vmem:[#allocation2 + $0x8] sm:$0xff]
    %v27 = vld [vmem:[#allocation2 + $0x10] sm:$0xff]
    %v28 = vld [vmem:[#allocation2 + $0x18] sm:$0xff]
    %v29 = vld [vmem:[#allocation2 + $0x20] sm:$0xff]
    %v30 = vld [vmem:[#allocation2 + $0x28] sm:$0xff]
    %v31 = vld [vmem:[#allocation2 + $0x30] sm:$0xff]
    %v32 = vld [vmem:[#allocation2 + $0x38] sm:$0xff]
    %v33 = vmul.f32 %v25, %v25
    %v34 = vmul.f32 %v26, %v26
    %v35 = vmul.f32 %v27, %v27
    %v36 = vmul.f32 %v28, %v28
    %v37 = vmul.f32 %v29, %v29
    %v38 = vmul.f32 %v30, %v30
    %v39 = vmul.f32 %v31, %v31
    %v40 = vmul.f32 %v32, %v32
    %vm41 = vcmask 130048
    %v42 = vsel %vm41, %v33, 0.0
    %43 = vadd.xlane.f32.xlu0 %v42
    %v44 = vpop.xlane.xlu0 %43
    %v45 = vsel %vm41, %v34, 0.0
    %46 = vadd.xlane.f32.xlu0 %v45
    %v47 = vpop.xlane.xlu0 %46
    %v48 = vsel %vm41, %v35, 0.0
    %49 = vadd.xlane.f32.xlu0 %v48
    %v50 = vpop.xlane.xlu0 %49
    %v51 = vsel %vm41, %v36, 0.0
    %52 = vadd.xlane.f32.xlu0 %v51
    %v53 = vpop.xlane.xlu0 %52
    %v54 = vsel %vm41, %v37, 0.0
    %55 = vadd.xlane.f32.xlu0 %v54
    %v56 = vpop.xlane.xlu0 %55
    %v57 = vsel %vm41, %v38, 0.0
    %58 = vadd.xlane.f32.xlu0 %v57
    %v59 = vpop.xlane.xlu0 %58
    %v60 = vsel %vm41, %v39, 0.0
    %61 = vadd.xlane.f32.xlu0 %v60
    %v62 = vpop.xlane.xlu0 %61
    %v63 = vsel %vm41, %v40, 0.0
    %64 = vadd.xlane.f32.xlu0 %v63
    %v65 = vpop.xlane.xlu0 %64
    %v66 = vrcp.pop 16.0
    %v67 = vmul.f32 16.0, %v66
    %v68 = vsub.f32 1.0, %v67
    %v69 = vmul.f32 %v66, %v68
    %v70 = vadd.f32 %v66, %v69
    %vm71 = vweird.f32 %v66
    %v72 = vsel %vm71, %v66, %v70
    %v73 = vmul.f32 %v44, %v72
    %v74 = vmul.f32 %v47, %v72
    %v75 = vmul.f32 %v50, %v72
    %v76 = vmul.f32 %v53, %v72
    %v77 = vmul.f32 %v56, %v72
    %v78 = vmul.f32 %v59, %v72
    %v79 = vmul.f32 %v62, %v72
    %v80 = vmul.f32 %v65, %v72
    %v81 = vadd.f32 %v73, 1e-06
    %v82 = vadd.f32 %v74, 1e-06
    %v83 = vadd.f32 %v75, 1e-06
    %v84 = vadd.f32 %v76, 1e-06
    %v85 = vadd.f32 %v77, 1e-06
    %v86 = vadd.f32 %v78, 1e-06
    %v87 = vadd.f32 %v79, 1e-06
    %v88 = vadd.f32 %v80, 1e-06
    %v89 = vrsqrt.pop %v81
    %v90 = vmul.f32 %v89, %v81
    %v91 = vmul.f32 %v90, %v89
    %v92 = vmul.f32 0.5, %v91
    %v93 = vsub.f32 1.5, %v92
    %v94 = vmul.f32 %v89, %v93
    %vm95 = vweird.f32 %v81
    %vm96 = vweird.f32 %v89
    %vm97 = vmor %vm95, %vm96
    %v98 = vsel %vm97, %v89, %v94
    %v99 = vrsqrt.pop %v82
    %v100 = vmul.f32 %v99, %v82
    %v101 = vmul.f32 %v100, %v99
    %v102 = vmul.f32 0.5, %v101
    %v103 = vsub.f32 1.5, %v102
    %v104 = vmul.f32 %v99, %v103
    %vm105 = vweird.f32 %v82
    %vm106 = vweird.f32 %v99
    %vm107 = vmor %vm105, %vm106
    %v108 = vsel %vm107, %v99, %v104
    %v109 = vrsqrt.pop %v83
    %v110 = vmul.f32 %v109, %v83
    %v111 = vmul.f32 %v110, %v109
    %v112 = vmul.f32 0.5, %v111
    %v113 = vsub.f32 1.5, %v112
    %v114 = vmul.f32 %v109, %v113
    %vm115 = vweird.f32 %v83
    %vm116 = vweird.f32 %v109
    %vm117 = vmor %vm115, %vm116
    %v118 = vsel %vm117, %v109, %v114
    %v119 = vrsqrt.pop %v84
    %v120 = vmul.f32 %v119, %v84
    %v121 = vmul.f32 %v120, %v119
    %v122 = vmul.f32 0.5, %v121
    %v123 = vsub.f32 1.5, %v122
    %v124 = vmul.f32 %v119, %v123
    %vm125 = vweird.f32 %v84
    %vm126 = vweird.f32 %v119
    %vm127 = vmor %vm125, %vm126
    %v128 = vsel %vm127, %v119, %v124
    %v129 = vrsqrt.pop %v85
    %v130 = vmul.f32 %v129, %v85
    %v131 = vmul.f32 %v130, %v129
    %v132 = vmul.f32 0.5, %v131
    %v133 = vsub.f32 1.5, %v132
    %v134 = vmul.f32 %v129, %v133
    %vm135 = vweird.f32 %v85
    %vm136 = vweird.f32 %v129
    %vm137 = vmor %vm135, %vm136
    %v138 = vsel %vm137, %v129, %v134
    %v139 = vrsqrt.pop %v86
    %v140 = vmul.f32 %v139, %v86
    %v141 = vmul.f32 %v140, %v139
    %v142 = vmul.f32 0.5, %v141
    %v143 = vsub.f32 1.5, %v142
    %v144 = vmul.f32 %v139, %v143
    %vm145 = vweird.f32 %v86
    %vm146 = vweird.f32 %v139
    %vm147 = vmor %vm145, %vm146
    %v148 = vsel %vm147, %v139, %v144
    %v149 = vrsqrt.pop %v87
    %v150 = vmul.f32 %v149, %v87
    %v151 = vmul.f32 %v150, %v149
    %v152 = vmul.f32 0.5, %v151
    %v153 = vsub.f32 1.5, %v152
    %v154 = vmul.f32 %v149, %v153
    %vm155 = vweird.f32 %v87
    %vm156 = vweird.f32 %v149
    %vm157 = vmor %vm155, %vm156
    %v158 = vsel %vm157, %v149, %v154
    %v159 = vrsqrt.pop %v88
    %v160 = vmul.f32 %v159, %v88
    %v161 = vmul.f32 %v160, %v159
    %v162 = vmul.f32 0.5, %v161
    %v163 = vsub.f32 1.5, %v162
    %v164 = vmul.f32 %v159, %v163
    %vm165 = vweird.f32 %v88
    %vm166 = vweird.f32 %v159
    %vm167 = vmor %vm165, %vm166
    %v168 = vsel %vm167, %v159, %v164
    %v169 = vmul.f32 %v25, %v98
    %v170 = vmul.f32 %v26, %v108
    %v171 = vmul.f32 %v27, %v118
    %v172 = vmul.f32 %v28, %v128
    %v173 = vmul.f32 %v29, %v138
    %v174 = vmul.f32 %v30, %v148
    %v175 = vmul.f32 %v31, %v158
    %v176 = vmul.f32 %v32, %v168
    %177 = vst.msk [vmem:[#allocation5] sm:$0xff] %vm41, %v169
    %178 = vst.msk [vmem:[#allocation5 + $0x8] sm:$0xff] %vm41, %v170
    %179 = vst.msk [vmem:[#allocation5 + $0x10] sm:$0xff] %vm41, %v171
    %180 = vst.msk [vmem:[#allocation5 + $0x18] sm:$0xff] %vm41, %v172
    %181 = vst.msk [vmem:[#allocation5 + $0x20] sm:$0xff] %vm41, %v173
    %182 = vst.msk [vmem:[#allocation5 + $0x28] sm:$0xff] %vm41, %v174
    %183 = vst.msk [vmem:[#allocation5 + $0x30] sm:$0xff] %vm41, %v175
    %184 = vst.msk [vmem:[#allocation5 + $0x38] sm:$0xff] %vm41, %v176
    // Predicated region
    $region10: #{l2norm_forward.1} parent=1 // pred_check
      _
    $region11: #{l2norm_forward.1} parent=1 // pred_check_branch
      %186 = sbr.rel (0) target = $region13
    $region12: #{l2norm_forward.1} parent=1 // pred_region
      %188 = vsyncadd [#allocation4], 0
      %s189 = sshll.u32 [#allocation5], 4
      %s190 = int_to_ptr.vmem [resolvable:$true] %s189
      %s191 = sshll.u32 %s1, 4
      %s192 = int_to_ptr.hbm [resolvable:$true] %s191
      %197 = dma.vmem_to_hbm [thread:$0]  %s190, 1024, %s192, [#allocation4], 128, 128, 8
    $region13: #{l2norm_forward.1} parent=1 // pred_fallthru
      _
    // Predicated region
    $region14: #{l2norm_forward.1} parent=1 // pred_check
      _
    $region15: #{l2norm_forward.1} parent=1 // pred_check_branch
      %199 = sbr.rel (0) target = $region17
    $region16: #{l2norm_forward.1} parent=1 // pred_region
      %201 = dma.done [#allocation4], 1024
    $region17: #{l2norm_forward.1} parent=1 // pred_fallthru
      _
    %202 = vsyncpa [#allocation3], 1
    %203 = vsyncpa [#allocation4], 1

</llo_original>
